<compile_context>
chip_gen: v6e
topology: v6e:2x2x1
jax: 0.10.0
libtpu: 0.0.40
codegen_flags: <defaults>
</compile_context>

<pallas_src>
import functools

import jax
import jax.numpy as jnp
from jax.experimental import pallas as pl
from jax.experimental.pallas import tpu as pltpu


def _round_up(x, m):
    return ((x + m - 1) // m) * m


def _linear_relu_kernel(x_ref, wt_ref, b_ref, o_ref):
    """o = relu(x @ W^T + b) for one row tile (lane-dense padded emb width)."""
    h = jnp.dot(x_ref[...], wt_ref[...], preferred_element_type=jnp.float32)
    h = jnp.maximum(h + b_ref[...], 0.0)
    o_ref[...] = h.astype(o_ref.dtype)


def _propagate_kernel(g_ref, h_ref, o_ref, acc_ref):
    """One tile of o = g @ h with f32 VMEM accumulator over the contraction axis."""
    @pl.when(pl.program_id(1) == 0)
    def _():
        acc_ref[...] = jnp.zeros_like(acc_ref)

    # g tile is bf16 (cast once in the wrapper); cast the small h tile in-kernel.
    acc_ref[...] += jnp.dot(
        g_ref[...],
        h_ref[...].astype(jnp.bfloat16),
        preferred_element_type=jnp.float32,
    )

    @pl.when(pl.program_id(1) == pl.num_programs(1) - 1)
    def _():
        o_ref[...] = acc_ref[...].astype(o_ref.dtype)


def sgc_forward(x, g, weight, bias, *, k, tile_m=512, tile_k=512):
    """SGC forward (dense / sparse=False path).

    x      : [N, in_dim]        float32
    g      : [N, N]             float32 dense adjacency
    weight : [emb_dim, in_dim]  (PyTorch nn.Linear layout)
    bias   : [emb_dim]
    """
    n, in_dim = x.shape
    emb_dim = weight.shape[0]

    emb_pad = _round_up(emb_dim, 128)               # lane-dense output width
    n_pad = _round_up(n, max(tile_m, tile_k))       # rows/contraction padded to tiles
    tm = min(tile_m, n_pad)
    tk = min(tile_k, n_pad)

    # Zero-padded operands.  Padded g rows/cols are zero, so padded nodes never
    # contaminate real rows; the final slice removes them.
    x_p = jnp.zeros((n_pad, in_dim), jnp.float32).at[:n, :].set(x)
    g_p = (jnp.zeros((n_pad, n_pad), jnp.float32)
           .at[:n, :n].set(g)
           .astype(jnp.bfloat16))
    wt_p = jnp.zeros((in_dim, emb_pad), jnp.float32).at[:, :emb_dim].set(weight.T)
    b_p = jnp.zeros((1, emb_pad), jnp.float32).at[0, :emb_dim].set(bias)

    vmem_cap = 48 << 20  # leave headroom for double buffers on v7x (64 MiB/TC)

    # ---- Kernel 1: fused Linear + ReLU, tiled over node rows ----------------
    lin_cost = pl.CostEstimate(
        flops=2 * n_pad * in_dim * emb_pad,
        transcendentals=0,
        bytes_accessed=(x_p.size + wt_p.size + b_p.size + n_pad * emb_pad) * 4,
    )
    h = pl.pallas_call(
        _linear_relu_kernel,
        out_shape=jax.ShapeDtypeStruct((n_pad, emb_pad), jnp.float32),
        grid=(n_pad // tm,),
        in_specs=[
            pl.BlockSpec((tm, in_dim), lambda i: (i, 0)),
            pl.BlockSpec((in_dim, emb_pad), lambda i: (0, 0)),
            pl.BlockSpec((1, emb_pad), lambda i: (0, 0)),
        ],
        out_specs=pl.BlockSpec((tm, emb_pad), lambda i: (i, 0)),
        compiler_params=pltpu.CompilerParams(
            dimension_semantics=("parallel",),
            vmem_limit_bytes=vmem_cap,
        ),
        cost_estimate=lin_cost,
    )(x_p, wt_p, b_p)

    # ---- Kernel 2: tiled dense propagation h <- g @ h, applied k times ------
    prop_cost = pl.CostEstimate(
        flops=2 * n_pad * n_pad * emb_pad,
        transcendentals=0,
        bytes_accessed=n_pad * n_pad * 2 + 2 * n_pad * emb_pad * 4,
    )
    propagate = pl.pallas_call(
        _propagate_kernel,
        out_shape=jax.ShapeDtypeStruct((n_pad, emb_pad), jnp.float32),
        grid=(n_pad // tm, n_pad // tk),
        in_specs=[
            pl.BlockSpec((tm, tk), lambda i, j: (i, j)),        # g tile (bf16)
            pl.BlockSpec((tk, emb_pad), lambda i, j: (j, 0)),   # h tile (f32)
        ],
        out_specs=pl.BlockSpec((tm, emb_pad), lambda i, j: (i, 0)),
        scratch_shapes=[pltpu.VMEM((tm, emb_pad), jnp.float32)],
        compiler_params=pltpu.CompilerParams(
            dimension_semantics=("parallel", "arbitrary"),
            vmem_limit_bytes=vmem_cap,
        ),
        cost_estimate=prop_cost,
    )

    for _ in range(k):          # k is tiny and static -> unrolled at trace time
        h = propagate(g_p, h)

    return h[:n, :emb_dim]


def sgc_reference(x, g, weight, bias, *, k):
    h = jax.nn.relu(x @ weight.T + bias)
    for _ in range(k):
        h = g @ h
    return h


if __name__ == "__main__":
    # Module config: nlayers=2 (=k), in_dim=8, emb_dim=32, sparse=False.
    nlayers = 2
    n_nodes = 16
    in_dim = 8
    emb_dim = 32

    key = jax.random.PRNGKey(0)
    kx, kg, kw, kb = jax.random.split(key, 4)

    x = jax.random.normal(kx, (n_nodes, in_dim), dtype=jnp.float32)
    # Dense row-normalized adjacency-like matrix.
    g_raw = jax.random.uniform(kg, (n_nodes, n_nodes), dtype=jnp.float32)
    g = g_raw / jnp.sum(g_raw, axis=1, keepdims=True)

    # Deterministic parameter init matching nn.Linear(in_dim, emb_dim) shapes.
    bound = 1.0 / (in_dim ** 0.5)
    weight = jax.random.uniform(kw, (emb_dim, in_dim), dtype=jnp.float32,
                                minval=-bound, maxval=bound)
    bias = jax.random.uniform(kb, (emb_dim,), dtype=jnp.float32,
                              minval=-bound, maxval=bound)

    out = sgc_forward(x, g, weight, bias, k=nlayers)
    out = jax.block_until_ready(out)

    ref = sgc_reference(x, g, weight, bias, k=nlayers)
    assert out.shape == (n_nodes, emb_dim)
    # Relaxed tolerance: g/h enter the propagation MXU as bf16 (f32 accumulate).
    assert jnp.allclose(out, ref, atol=3e-2, rtol=3e-2), "mismatch vs reference"

    # TODO(synk): the sparse=True DGL message-passing branch (u_mul_e + sum)
    # would need a gather/segment-sum kernel; only the dense path is implemented.
    print("KERNEL_OK")
</pallas_src>

<mosaic_0001>
module attributes {stable_mosaic.version = 11 : i64} {
  func.func @_linear_relu_kernel(%arg0: i32, %arg1: memref<512x8xf32, #tpu.memory_space<vmem>>, %arg2: memref<8x128xf32, #tpu.memory_space<vmem>>, %arg3: memref<1x128xf32, #tpu.memory_space<vmem>>, %arg4: memref<512x128xf32, #tpu.memory_space<vmem>>) attributes {dimension_semantics = [#tpu.dimension_semantics<parallel>], iteration_bounds = array<i64: 1>, scalar_prefetch = 0 : i64, scratch_operands = 0 : i64, tpu.core_type = #tpu.core_type<tc>, window_params = [{transform_indices = @transform_0, window_bounds = array<i64: 512, 8>}, {pipeline_mode = #tpu.pipeline_mode<synchronous>, transform_indices = @transform_1, window_bounds = array<i64: 8, 128>}, {pipeline_mode = #tpu.pipeline_mode<synchronous>, transform_indices = @transform_2, window_bounds = array<i64: 1, 128>}, {transform_indices = @transform_3, window_bounds = array<i64: 512, 128>}]} {
    %c0 = arith.constant 0 : index
    %c0_0 = arith.constant 0 : index
    %0 = vector.load %arg1[%c0, %c0_0] : memref<512x8xf32, #tpu.memory_space<vmem>>, vector<512x8xf32>
    %c0_1 = arith.constant 0 : index
    %c0_2 = arith.constant 0 : index
    %1 = vector.load %arg2[%c0_1, %c0_2] : memref<8x128xf32, #tpu.memory_space<vmem>>, vector<8x128xf32>
    %cst = arith.constant dense<0.000000e+00> : vector<512x128xf32>
    %2 = tpu.matmul %0, %1, %cst {dimension_numbers = #tpu.dot_dimension_numbers<[1], [0], [0], [1], [0, 0, 1, 1], [], []>} : vector<512x8xf32>, vector<8x128xf32>, vector<512x128xf32> -> vector<512x128xf32>
    %c0_3 = arith.constant 0 : index
    %c0_4 = arith.constant 0 : index
    %3 = vector.load %arg3[%c0_3, %c0_4] : memref<1x128xf32, #tpu.memory_space<vmem>>, vector<1x128xf32>
    %4 = vector.broadcast %3 : vector<1x128xf32> to vector<512x128xf32>
    %5 = arith.addf %2, %4 : vector<512x128xf32>
    %cst_5 = arith.constant 0.000000e+00 : f32
    %6 = vector.broadcast %cst_5 : f32 to vector<512x128xf32>
    %7 = arith.maximumf %5, %6 : vector<512x128xf32>
    %c0_6 = arith.constant 0 : index
    %c0_7 = arith.constant 0 : index
    %8 = vector.load %arg4[%c0_6, %c0_7] : memref<512x128xf32, #tpu.memory_space<vmem>>, vector<512x128xf32>
    tpu.vector_store %arg4[%c0_6, %c0_7], %7 {strides = array<i32>} : memref<512x128xf32, #tpu.memory_space<vmem>>, vector<512x128xf32>,
    return
  }
  func.func @transform_0(%arg0: i32) -> (i32, i32) {
    %c0_i32 = arith.constant 0 : i32
    %c0_i32_0 = arith.constant 0 : i32
    return %arg0, %c0_i32 : i32, i32
  }
  func.func @transform_1(%arg0: i32) -> (i32, i32) {
    %c0_i32 = arith.constant 0 : i32
    %c0_i32_0 = arith.constant 0 : i32
    %c0_i32_1 = arith.constant 0 : i32
    return %c0_i32, %c0_i32_0 : i32, i32
  }
  func.func @transform_2(%arg0: i32) -> (i32, i32) {
    %c0_i32 = arith.constant 0 : i32
    %c0_i32_0 = arith.constant 0 : i32
    %c0_i32_1 = arith.constant 0 : i32
    return %c0_i32, %c0_i32_0 : i32, i32
  }
  func.func @transform_3(%arg0: i32) -> (i32, i32) {
    %c0_i32 = arith.constant 0 : i32
    %c0_i32_0 = arith.constant 0 : i32
    return %arg0, %c0_i32 : i32, i32
  }
}

</mosaic_0001>

<llo_original>
// kernel: tpu_custom_call.1
$region0: #{tpu_custom_call.1}
  #allocation0 [shape = 'u32[]', space=smem, size = 0x4, offset = 0x4, fixed_abs, tag = 'smem constant byte address 0x4 - core index']
  #allocation1 [shape = 'u32[144,128]{1,0:T(1,128)}', space=vmem, size = 0x12000, scoped, tag = 'internal scratch']
  %s0 = inlined_call_operand.vmem [shape: f32[512,8], index: 0, kind: input, shape index: {}]
  %s1 = inlined_call_operand.vmem [shape: f32[8,128], index: 1, kind: input, shape index: {}]
  %s2 = inlined_call_operand.vmem [shape: f32[1,128], index: 2, kind: input, shape index: {}]
  %s3 = inlined_call_operand.hbm [shape: f32[512,128], index: 3, kind: output, shape index: {}]
  %s4 = sld [smem:[#allocation0]]
  $region22: #{tpu_custom_call.1} parent=0
    _
  %s6 = ssub.s32 1, %s4
  %s7 = scalar_select 0, %s6, %s4
  $region1: #{tpu_custom_call.1} parent=0
    #allocation2 [shape = 'u8[262144]{0}', space=vmem, size = 0x40000, scoped, tag = 'output window, operand 0, single buffered']
    #allocation3 [shape = 's32[1]{0}', space=sflag, size = 0x4, scoped, tag = 'scoped memory for tpu_custom_call.1']
    %8 = vsyncpa [#allocation3], 0
    // Predicated region
    $region2: #{tpu_custom_call.1} parent=1 // pred_check
      _
    $region3: #{tpu_custom_call.1} parent=1 // pred_check_branch
      %10 = sbr.rel (0) target = $region5
    $region4: #{tpu_custom_call.1} parent=1 // pred_region
      _
    $region5: #{tpu_custom_call.1} parent=1 // pred_fallthru
      _
    // Predicated region
    $region6: #{tpu_custom_call.1} parent=1 // pred_check
      _
    $region7: #{tpu_custom_call.1} parent=1 // pred_check_branch
      %12 = sbr.rel (0) target = $region9
    $region8: #{tpu_custom_call.1} parent=1 // pred_region
      _
    $region9: #{tpu_custom_call.1} parent=1 // pred_fallthru
      _
    // Predicated region
    $region10: #{tpu_custom_call.1} parent=1 // pred_check
      _
    $region11: #{tpu_custom_call.1} parent=1 // pred_check_branch
      %14 = sbr.rel (0) target = $region13
    $region12: #{tpu_custom_call.1} parent=1 // pred_region
      _
    $region13: #{tpu_custom_call.1} parent=1 // pred_fallthru
      _
    %v15 = vld [vmem:[%s0] sm:$0xff]
    %v16 = vld [vmem:[%s0 + $0x8] sm:$0xff]
    %v17 = vld [vmem:[%s0 + $0x10] sm:$0xff]
    %v18 = vld [vmem:[%s0 + $0x18] sm:$0xff]
    %v19 = vld [vmem:[%s0 + $0x20] sm:$0xff]
    %v20 = vld [vmem:[%s0 + $0x28] sm:$0xff]
    %v21 = vld [vmem:[%s0 + $0x30] sm:$0xff]
    %v22 = vld [vmem:[%s0 + $0x38] sm:$0xff]
    %v23 = vld [vmem:[%s0 + $0x40] sm:$0xff]
    %v24 = vld [vmem:[%s0 + $0x48] sm:$0xff]
    %v25 = vld [vmem:[%s0 + $0x50] sm:$0xff]
    %v26 = vld [vmem:[%s0 + $0x58] sm:$0xff]
    %v27 = vld [vmem:[%s0 + $0x60] sm:$0xff]
    %v28 = vld [vmem:[%s0 + $0x68] sm:$0xff]
    %v29 = vld [vmem:[%s0 + $0x70] sm:$0xff]
    %v30 = vld [vmem:[%s0 + $0x78] sm:$0xff]
    %v31 = vld [vmem:[%s0 + $0x80] sm:$0xff]
    %v32 = vld [vmem:[%s0 + $0x88] sm:$0xff]
    %v33 = vld [vmem:[%s0 + $0x90] sm:$0xff]
    %v34 = vld [vmem:[%s0 + $0x98] sm:$0xff]
    %v35 = vld [vmem:[%s0 + $0xa0] sm:$0xff]
    %v36 = vld [vmem:[%s0 + $0xa8] sm:$0xff]
    %v37 = vld [vmem:[%s0 + $0xb0] sm:$0xff]
    %v38 = vld [vmem:[%s0 + $0xb8] sm:$0xff]
    %v39 = vld [vmem:[%s0 + $0xc0] sm:$0xff]
    %v40 = vld [vmem:[%s0 + $0xc8] sm:$0xff]
    %v41 = vld [vmem:[%s0 + $0xd0] sm:$0xff]
    %v42 = vld [vmem:[%s0 + $0xd8] sm:$0xff]
    %v43 = vld [vmem:[%s0 + $0xe0] sm:$0xff]
    %v44 = vld [vmem:[%s0 + $0xe8] sm:$0xff]
    %v45 = vld [vmem:[%s0 + $0xf0] sm:$0xff]
    %v46 = vld [vmem:[%s0 + $0xf8] sm:$0xff]
    %v47 = vld [vmem:[%s0 + $0x100] sm:$0xff]
    %v48 = vld [vmem:[%s0 + $0x108] sm:$0xff]
    %v49 = vld [vmem:[%s0 + $0x110] sm:$0xff]
    %v50 = vld [vmem:[%s0 + $0x118] sm:$0xff]
    %v51 = vld [vmem:[%s0 + $0x120] sm:$0xff]
    %v52 = vld [vmem:[%s0 + $0x128] sm:$0xff]
    %v53 = vld [vmem:[%s0 + $0x130] sm:$0xff]
    %v54 = vld [vmem:[%s0 + $0x138] sm:$0xff]
    %v55 = vld [vmem:[%s0 + $0x140] sm:$0xff]
    %v56 = vld [vmem:[%s0 + $0x148] sm:$0xff]
    %v57 = vld [vmem:[%s0 + $0x150] sm:$0xff]
    %v58 = vld [vmem:[%s0 + $0x158] sm:$0xff]
    %v59 = vld [vmem:[%s0 + $0x160] sm:$0xff]
    %v60 = vld [vmem:[%s0 + $0x168] sm:$0xff]
    %v61 = vld [vmem:[%s0 + $0x170] sm:$0xff]
    %v62 = vld [vmem:[%s0 + $0x178] sm:$0xff]
    %v63 = vld [vmem:[%s0 + $0x180] sm:$0xff]
    %v64 = vld [vmem:[%s0 + $0x188] sm:$0xff]
    %v65 = vld [vmem:[%s0 + $0x190] sm:$0xff]
    %v66 = vld [vmem:[%s0 + $0x198] sm:$0xff]
    %v67 = vld [vmem:[%s0 + $0x1a0] sm:$0xff]
    %v68 = vld [vmem:[%s0 + $0x1a8] sm:$0xff]
    %v69 = vld [vmem:[%s0 + $0x1b0] sm:$0xff]
    %v70 = vld [vmem:[%s0 + $0x1b8] sm:$0xff]
    %v71 = vld [vmem:[%s0 + $0x1c0] sm:$0xff]
    %v72 = vld [vmem:[%s0 + $0x1c8] sm:$0xff]
    %v73 = vld [vmem:[%s0 + $0x1d0] sm:$0xff]
    %v74 = vld [vmem:[%s0 + $0x1d8] sm:$0xff]
    %v75 = vld [vmem:[%s0 + $0x1e0] sm:$0xff]
    %v76 = vld [vmem:[%s0 + $0x1e8] sm:$0xff]
    %v77 = vld [vmem:[%s0 + $0x1f0] sm:$0xff]
    %v78 = vld [vmem:[%s0 + $0x1f8] sm:$0xff]
    %v79 = vld [vmem:[%s1] sm:$0xff]
    %v80 = vld [vmem:[%s2] sm:$0x1]
    %v82 = vlaneseq
    %v83 = vshrl.u32 %v82, 7
    %v84 = vsub.s32 0, %v83
    %v85 = vrot.slane %v80, %v84
    %vm87 = vcmask 64512
    %v89 = vsel %vm87, %v15, 0
    %v92 = vsel %vm87, %v16, 0
    %v95 = vsel %vm87, %v17, 0
    %v98 = vsel %vm87, %v18, 0
    %v101 = vsel %vm87, %v19, 0
    %v104 = vsel %vm87, %v20, 0
    %v107 = vsel %vm87, %v21, 0
    %v110 = vsel %vm87, %v22, 0
    %v113 = vsel %vm87, %v23, 0
    %v116 = vsel %vm87, %v24, 0
    %v119 = vsel %vm87, %v25, 0
    %v122 = vsel %vm87, %v26, 0
    %v125 = vsel %vm87, %v27, 0
    %v128 = vsel %vm87, %v28, 0
    %v131 = vsel %vm87, %v29, 0
    %v134 = vsel %vm87, %v30, 0
    %v137 = vsel %vm87, %v31, 0
    %v140 = vsel %vm87, %v32, 0
    %v143 = vsel %vm87, %v33, 0
    %v146 = vsel %vm87, %v34, 0
    %v149 = vsel %vm87, %v35, 0
    %v152 = vsel %vm87, %v36, 0
    %v155 = vsel %vm87, %v37, 0
    %v158 = vsel %vm87, %v38, 0
    %v161 = vsel %vm87, %v39, 0
    %v164 = vsel %vm87, %v40, 0
    %v167 = vsel %vm87, %v41, 0
    %v170 = vsel %vm87, %v42, 0
    %v173 = vsel %vm87, %v43, 0
    %v176 = vsel %vm87, %v44, 0
    %v179 = vsel %vm87, %v45, 0
    %v182 = vsel %vm87, %v46, 0
    %v185 = vsel %vm87, %v47, 0
    %v188 = vsel %vm87, %v48, 0
    %v191 = vsel %vm87, %v49, 0
    %v194 = vsel %vm87, %v50, 0
    %v197 = vsel %vm87, %v51, 0
    %v200 = vsel %vm87, %v52, 0
    %v203 = vsel %vm87, %v53, 0
    %v206 = vsel %vm87, %v54, 0
    %v209 = vsel %vm87, %v55, 0
    %v212 = vsel %vm87, %v56, 0
    %v215 = vsel %vm87, %v57, 0
    %v218 = vsel %vm87, %v58, 0
    %v221 = vsel %vm87, %v59, 0
    %v224 = vsel %vm87, %v60, 0
    %v227 = vsel %vm87, %v61, 0
    %v230 = vsel %vm87, %v62, 0
    %v233 = vsel %vm87, %v63, 0
    %v236 = vsel %vm87, %v64, 0
    %v239 = vsel %vm87, %v65, 0
    %v242 = vsel %vm87, %v66, 0
    %v245 = vsel %vm87, %v67, 0
    %v248 = vsel %vm87, %v68, 0
    %v251 = vsel %vm87, %v69, 0
    %v254 = vsel %vm87, %v70, 0
    %v257 = vsel %vm87, %v71, 0
    %v260 = vsel %vm87, %v72, 0
    %v263 = vsel %vm87, %v73, 0
    %v266 = vsel %vm87, %v74, 0
    %v269 = vsel %vm87, %v75, 0
    %v272 = vsel %vm87, %v76, 0
    %v275 = vsel %vm87, %v77, 0
    %v278 = vsel %vm87, %v78, 0
    %280 = vmatprep.subr.mxu0 0.0
    %281 = vmatpush1.msra.mxu0 0.0
    %282 = vmatprep.subr.mxu0 0.0
    %283 = vmatpush1.msra.mxu0 0.0
    %284 = vmatprep.subr.mxu0 0.0
    %285 = vmatpush1.msra.mxu0 0.0
    %286 = vmatprep.subr.mxu0 0.0
    %287 = vmatpush1.msra.mxu0 0.0
    %288 = vmatprep.subr.mxu0 0.0
    %289 = vmatpush1.msra.mxu0 0.0
    %290 = vmatprep.subr.mxu0 0.0
    %291 = vmatpush1.msra.mxu0 0.0
    %292 = vmatprep.subr.mxu0 0.0
    %293 = vmatpush1.msra.mxu0 0.0
    %294 = vmatprep.subr.mxu0 0.0
    %295 = vmatpush1.msra.mxu0 0.0
    %296 = vmatprep.subr.mxu0 0.0
    %297 = vmatpush1.msra.mxu0 0.0
    %298 = vmatprep.subr.mxu0 0.0
    %299 = vmatpush1.msra.mxu0 0.0
    %300 = vmatprep.subr.mxu0 0.0
    %301 = vmatpush1.msra.mxu0 0.0
    %302 = vmatprep.subr.mxu0 0.0
    %303 = vmatpush1.msra.mxu0 0.0
    %304 = vmatprep.subr.mxu0 0.0
    %305 = vmatpush1.msra.mxu0 0.0
    %306 = vmatprep.subr.mxu0 0.0
    %307 = vmatpush1.msra.mxu0 0.0
    %308 = vmatprep.subr.mxu0 0.0
    %309 = vmatpush1.msra.mxu0 0.0
    %310 = vmatprep.subr.mxu0 0.0
    %311 = vmatpush1.msra.mxu0 %v79
    %312 = vmatprep.subr.mxu0 0.0
    %313 = vmatpush2.msra.mxu0 0.0
    %314 = vmatprep.subr.mxu0 0.0
    %315 = vmatpush2.msra.mxu0 0.0
    %316 = vmatprep.subr.mxu0 0.0
    %317 = vmatpush2.msra.mxu0 0.0
    %318 = vmatprep.subr.mxu0 0.0
    %319 = vmatpush2.msra.mxu0 0.0
    %320 = vmatprep.subr.mxu0 0.0
    %321 = vmatpush2.msra.mxu0 0.0
    %322 = vmatprep.subr.mxu0 0.0
    %323 = vmatpush2.msra.mxu0 0.0
    %324 = vmatprep.subr.mxu0 0.0
    %325 = vmatpush2.msra.mxu0 0.0
    %326 = vmatprep.subr.mxu0 0.0
    %327 = vmatpush2.msra.mxu0 0.0
    %328 = vmatprep.subr.mxu0 0.0
    %329 = vmatpush2.msra.mxu0 0.0
    %330 = vmatprep.subr.mxu0 0.0
    %331 = vmatpush2.msra.mxu0 0.0
    %332 = vmatprep.subr.mxu0 0.0
    %333 = vmatpush2.msra.mxu0 0.0
    %334 = vmatprep.subr.mxu0 0.0
    %335 = vmatpush2.msra.mxu0 0.0
    %336 = vmatprep.subr.mxu0 0.0
    %337 = vmatpush2.msra.mxu0 0.0
    %338 = vmatprep.subr.mxu0 0.0
    %339 = vmatpush2.msra.mxu0 0.0
    %340 = vmatprep.subr.mxu0 0.0
    %341 = vmatpush2.msra.mxu0 0.0
    %342 = vmatprep.subr.mxu0 0.0
    %343 = vmatpush2.msra.mxu0 0.0
    %344 = vmatprep.mubr.f32.mxu0 0.0
    %345 = vmatmul.mubr.f32.gmra.mxu0 %v89
    %v346 = vpop.f32.mrf.mxu0
    %v347 = vadd.f32 %v85, %v346
    %v348 = vpop.f32.mrf.mxu0
    %349 = vmatprep.mubr.f32.mxu0 0.0
    %350 = vmatmul.mubr.f32.gmra.mxu0 %v92
    %v351 = vpop.f32.mrf.mxu0
    %v352 = vadd.f32 %v85, %v351
    %v353 = vpop.f32.mrf.mxu0
    %354 = vmatprep.mubr.f32.mxu0 0.0
    %355 = vmatmul.mubr.f32.gmra.mxu0 %v95
    %v356 = vpop.f32.mrf.mxu0
    %v357 = vadd.f32 %v85, %v356
    %v358 = vpop.f32.mrf.mxu0
    %359 = vmatprep.mubr.f32.mxu0 0.0
    %360 = vmatmul.mubr.f32.gmra.mxu0 %v98
    %v361 = vpop.f32.mrf.mxu0
    %v362 = vadd.f32 %v85, %v361
    %v363 = vpop.f32.mrf.mxu0
    %364 = vmatprep.mubr.f32.mxu0 0.0
    %365 = vmatmul.mubr.f32.gmra.mxu0 %v101
    %v366 = vpop.f32.mrf.mxu0
    %v367 = vadd.f32 %v85, %v366
    %v368 = vpop.f32.mrf.mxu0
    %369 = vmatprep.mubr.f32.mxu0 0.0
    %370 = vmatmul.mubr.f32.gmra.mxu0 %v104
    %v371 = vpop.f32.mrf.mxu0
    %v372 = vadd.f32 %v85, %v371
    %v373 = vpop.f32.mrf.mxu0
    %374 = vmatprep.mubr.f32.mxu0 0.0
    %375 = vmatmul.mubr.f32.gmra.mxu0 %v107
    %v376 = vpop.f32.mrf.mxu0
    %v377 = vadd.f32 %v85, %v376
    %v378 = vpop.f32.mrf.mxu0
    %379 = vmatprep.mubr.f32.mxu0 0.0
    %380 = vmatmul.mubr.f32.gmra.mxu0 %v110
    %v381 = vpop.f32.mrf.mxu0
    %v382 = vadd.f32 %v85, %v381
    %v383 = vpop.f32.mrf.mxu0
    %384 = vmatprep.mubr.f32.mxu0 0.0
    %385 = vmatmul.mubr.f32.gmra.mxu0 %v113
    %v386 = vpop.f32.mrf.mxu0
    %v387 = vadd.f32 %v85, %v386
    %v388 = vpop.f32.mrf.mxu0
    %389 = vmatprep.mubr.f32.mxu0 0.0
    %390 = vmatmul.mubr.f32.gmra.mxu0 %v116
    %v391 = vpop.f32.mrf.mxu0
    %v392 = vadd.f32 %v85, %v391
    %v393 = vpop.f32.mrf.mxu0
    %394 = vmatprep.mubr.f32.mxu0 0.0
    %395 = vmatmul.mubr.f32.gmra.mxu0 %v119
    %v396 = vpop.f32.mrf.mxu0
    %v397 = vadd.f32 %v85, %v396
    %v398 = vpop.f32.mrf.mxu0
    %399 = vmatprep.mubr.f32.mxu0 0.0
    %400 = vmatmul.mubr.f32.gmra.mxu0 %v122
    %v401 = vpop.f32.mrf.mxu0
    %v402 = vadd.f32 %v85, %v401
    %v403 = vpop.f32.mrf.mxu0
    %404 = vmatprep.mubr.f32.mxu0 0.0
    %405 = vmatmul.mubr.f32.gmra.mxu0 %v125
    %v406 = vpop.f32.mrf.mxu0
    %v407 = vadd.f32 %v85, %v406
    %v408 = vpop.f32.mrf.mxu0
    %409 = vmatprep.mubr.f32.mxu0 0.0
    %410 = vmatmul.mubr.f32.gmra.mxu0 %v128
    %v411 = vpop.f32.mrf.mxu0
    %v412 = vadd.f32 %v85, %v411
    %v413 = vpop.f32.mrf.mxu0
    %414 = vmatprep.mubr.f32.mxu0 0.0
    %415 = vmatmul.mubr.f32.gmra.mxu0 %v131
    %v416 = vpop.f32.mrf.mxu0
    %v417 = vadd.f32 %v85, %v416
    %v418 = vpop.f32.mrf.mxu0
    %419 = vmatprep.mubr.f32.mxu0 0.0
    %420 = vmatmul.mubr.f32.gmra.mxu0 %v134
    %v421 = vpop.f32.mrf.mxu0
    %v422 = vadd.f32 %v85, %v421
    %v423 = vpop.f32.mrf.mxu0
    %424 = vmatprep.mubr.f32.mxu0 0.0
    %425 = vmatmul.mubr.f32.gmra.mxu0 %v137
    %v426 = vpop.f32.mrf.mxu0
    %v427 = vadd.f32 %v85, %v426
    %v428 = vpop.f32.mrf.mxu0
    %429 = vmatprep.mubr.f32.mxu0 0.0
    %430 = vmatmul.mubr.f32.gmra.mxu0 %v140
    %v431 = vpop.f32.mrf.mxu0
    %v432 = vadd.f32 %v85, %v431
    %v433 = vpop.f32.mrf.mxu0
    %434 = vmatprep.mubr.f32.mxu0 0.0
    %435 = vmatmul.mubr.f32.gmra.mxu0 %v143
    %v436 = vpop.f32.mrf.mxu0
    %v437 = vadd.f32 %v85, %v436
    %v438 = vpop.f32.mrf.mxu0
    %439 = vmatprep.mubr.f32.mxu0 0.0
    %440 = vmatmul.mubr.f32.gmra.mxu0 %v146
    %v441 = vpop.f32.mrf.mxu0
    %v442 = vadd.f32 %v85, %v441
    %v443 = vpop.f32.mrf.mxu0
    %444 = vmatprep.mubr.f32.mxu0 0.0
    %445 = vmatmul.mubr.f32.gmra.mxu0 %v149
    %v446 = vpop.f32.mrf.mxu0
    %v447 = vadd.f32 %v85, %v446
    %v448 = vpop.f32.mrf.mxu0
    %449 = vmatprep.mubr.f32.mxu0 0.0
    %450 = vmatmul.mubr.f32.gmra.mxu0 %v152
    %v451 = vpop.f32.mrf.mxu0
    %v452 = vadd.f32 %v85, %v451
    %v453 = vpop.f32.mrf.mxu0
    %454 = vmatprep.mubr.f32.mxu0 0.0
    %455 = vmatmul.mubr.f32.gmra.mxu0 %v155
    %v456 = vpop.f32.mrf.mxu0
    %v457 = vadd.f32 %v85, %v456
    %v458 = vpop.f32.mrf.mxu0
    %459 = vmatprep.mubr.f32.mxu0 0.0
    %460 = vmatmul.mubr.f32.gmra.mxu0 %v158
    %v461 = vpop.f32.mrf.mxu0
    %v462 = vadd.f32 %v85, %v461
    %v463 = vpop.f32.mrf.mxu0
    %464 = vmatprep.mubr.f32.mxu0 0.0
    %465 = vmatmul.mubr.f32.gmra.mxu0 %v161
    %v466 = vpop.f32.mrf.mxu0
    %v467 = vadd.f32 %v85, %v466
    %v468 = vpop.f32.mrf.mxu0
    %469 = vmatprep.mubr.f32.mxu0 0.0
    %470 = vmatmul.mubr.f32.gmra.mxu0 %v164
    %v471 = vpop.f32.mrf.mxu0
    %v472 = vadd.f32 %v85, %v471
    %v473 = vpop.f32.mrf.mxu0
    %474 = vmatprep.mubr.f32.mxu0 0.0
    %475 = vmatmul.mubr.f32.gmra.mxu0 %v167
    %v476 = vpop.f32.mrf.mxu0
    %v477 = vadd.f32 %v85, %v476
    %v478 = vpop.f32.mrf.mxu0
    %479 = vmatprep.mubr.f32.mxu0 0.0
    %480 = vmatmul.mubr.f32.gmra.mxu0 %v170
    %v481 = vpop.f32.mrf.mxu0
    %v482 = vadd.f32 %v85, %v481
    %v483 = vpop.f32.mrf.mxu0
    %484 = vmatprep.mubr.f32.mxu0 0.0
    %485 = vmatmul.mubr.f32.gmra.mxu0 %v173
    %v486 = vpop.f32.mrf.mxu0
    %v487 = vadd.f32 %v85, %v486
    %v488 = vpop.f32.mrf.mxu0
    %489 = vmatprep.mubr.f32.mxu0 0.0
    %490 = vmatmul.mubr.f32.gmra.mxu0 %v176
    %v491 = vpop.f32.mrf.mxu0
    %v492 = vadd.f32 %v85, %v491
    %v493 = vpop.f32.mrf.mxu0
    %494 = vmatprep.mubr.f32.mxu0 0.0
    %495 = vmatmul.mubr.f32.gmra.mxu0 %v179
    %v496 = vpop.f32.mrf.mxu0
    %v497 = vadd.f32 %v85, %v496
    %v498 = vpop.f32.mrf.mxu0
    %499 = vmatprep.mubr.f32.mxu0 0.0
    %500 = vmatmul.mubr.f32.gmra.mxu0 %v182
    %v501 = vpop.f32.mrf.mxu0
    %v502 = vadd.f32 %v85, %v501
    %v503 = vpop.f32.mrf.mxu0
    %504 = vmatprep.mubr.f32.mxu0 0.0
    %505 = vmatmul.mubr.f32.gmra.mxu0 %v185
    %v506 = vpop.f32.mrf.mxu0
    %v507 = vadd.f32 %v85, %v506
    %v508 = vpop.f32.mrf.mxu0
    %509 = vmatprep.mubr.f32.mxu0 0.0
    %510 = vmatmul.mubr.f32.gmra.mxu0 %v188
    %v511 = vpop.f32.mrf.mxu0
    %v512 = vadd.f32 %v85, %v511
    %v513 = vpop.f32.mrf.mxu0
    %514 = vmatprep.mubr.f32.mxu0 0.0
    %515 = vmatmul.mubr.f32.gmra.mxu0 %v191
    %v516 = vpop.f32.mrf.mxu0
    %v517 = vadd.f32 %v85, %v516
    %v518 = vpop.f32.mrf.mxu0
    %519 = vmatprep.mubr.f32.mxu0 0.0
    %520 = vmatmul.mubr.f32.gmra.mxu0 %v194
    %v521 = vpop.f32.mrf.mxu0
    %v522 = vadd.f32 %v85, %v521
    %v523 = vpop.f32.mrf.mxu0
    %524 = vmatprep.mubr.f32.mxu0 0.0
    %525 = vmatmul.mubr.f32.gmra.mxu0 %v197
    %v526 = vpop.f32.mrf.mxu0
    %v527 = vadd.f32 %v85, %v526
    %v528 = vpop.f32.mrf.mxu0
    %529 = vmatprep.mubr.f32.mxu0 0.0
    %530 = vmatmul.mubr.f32.gmra.mxu0 %v200
    %v531 = vpop.f32.mrf.mxu0
    %v532 = vadd.f32 %v85, %v531
    %v533 = vpop.f32.mrf.mxu0
    %534 = vmatprep.mubr.f32.mxu0 0.0
    %535 = vmatmul.mubr.f32.gmra.mxu0 %v203
    %v536 = vpop.f32.mrf.mxu0
    %v537 = vadd.f32 %v85, %v536
    %v538 = vpop.f32.mrf.mxu0
    %539 = vmatprep.mubr.f32.mxu0 0.0
    %540 = vmatmul.mubr.f32.gmra.mxu0 %v206
    %v541 = vpop.f32.mrf.mxu0
    %v542 = vadd.f32 %v85, %v541
    %v543 = vpop.f32.mrf.mxu0
    %544 = vmatprep.mubr.f32.mxu0 0.0
    %545 = vmatmul.mubr.f32.gmra.mxu0 %v209
    %v546 = vpop.f32.mrf.mxu0
    %v547 = vadd.f32 %v85, %v546
    %v548 = vpop.f32.mrf.mxu0
    %549 = vmatprep.mubr.f32.mxu0 0.0
    %550 = vmatmul.mubr.f32.gmra.mxu0 %v212
    %v551 = vpop.f32.mrf.mxu0
    %v552 = vadd.f32 %v85, %v551
    %v553 = vpop.f32.mrf.mxu0
    %554 = vmatprep.mubr.f32.mxu0 0.0
    %555 = vmatmul.mubr.f32.gmra.mxu0 %v215
    %v556 = vpop.f32.mrf.mxu0
    %v557 = vadd.f32 %v85, %v556
    %v558 = vpop.f32.mrf.mxu0
    %559 = vmatprep.mubr.f32.mxu0 0.0
    %560 = vmatmul.mubr.f32.gmra.mxu0 %v218
    %v561 = vpop.f32.mrf.mxu0
    %v562 = vadd.f32 %v85, %v561
    %v563 = vpop.f32.mrf.mxu0
    %564 = vmatprep.mubr.f32.mxu0 0.0
    %565 = vmatmul.mubr.f32.gmra.mxu0 %v221
    %v566 = vpop.f32.mrf.mxu0
    %v567 = vadd.f32 %v85, %v566
    %v568 = vpop.f32.mrf.mxu0
    %569 = vmatprep.mubr.f32.mxu0 0.0
    %570 = vmatmul.mubr.f32.gmra.mxu0 %v224
    %v571 = vpop.f32.mrf.mxu0
    %v572 = vadd.f32 %v85, %v571
    %v573 = vpop.f32.mrf.mxu0
    %574 = vmatprep.mubr.f32.mxu0 0.0
    %575 = vmatmul.mubr.f32.gmra.mxu0 %v227
    %v576 = vpop.f32.mrf.mxu0
    %v577 = vadd.f32 %v85, %v576
    %v578 = vpop.f32.mrf.mxu0
    %579 = vmatprep.mubr.f32.mxu0 0.0
    %580 = vmatmul.mubr.f32.gmra.mxu0 %v230
    %v581 = vpop.f32.mrf.mxu0
    %v582 = vadd.f32 %v85, %v581
    %v583 = vpop.f32.mrf.mxu0
    %584 = vmatprep.mubr.f32.mxu0 0.0
    %585 = vmatmul.mubr.f32.gmra.mxu0 %v233
    %v586 = vpop.f32.mrf.mxu0
    %v587 = vadd.f32 %v85, %v586
    %v588 = vpop.f32.mrf.mxu0
    %589 = vmatprep.mubr.f32.mxu0 0.0
    %590 = vmatmul.mubr.f32.gmra.mxu0 %v236
    %v591 = vpop.f32.mrf.mxu0
    %v592 = vadd.f32 %v85, %v591
    %v593 = vpop.f32.mrf.mxu0
    %594 = vmatprep.mubr.f32.mxu0 0.0
    %595 = vmatmul.mubr.f32.gmra.mxu0 %v239
    %v596 = vpop.f32.mrf.mxu0
    %v597 = vadd.f32 %v85, %v596
    %v598 = vpop.f32.mrf.mxu0
    %599 = vmatprep.mubr.f32.mxu0 0.0
    %600 = vmatmul.mubr.f32.gmra.mxu0 %v242
    %v601 = vpop.f32.mrf.mxu0
    %v602 = vadd.f32 %v85, %v601
    %v603 = vpop.f32.mrf.mxu0
    %604 = vmatprep.mubr.f32.mxu0 0.0
    %605 = vmatmul.mubr.f32.gmra.mxu0 %v245
    %v606 = vpop.f32.mrf.mxu0
    %v607 = vadd.f32 %v85, %v606
    %v608 = vpop.f32.mrf.mxu0
    %609 = vmatprep.mubr.f32.mxu0 0.0
    %610 = vmatmul.mubr.f32.gmra.mxu0 %v248
    %v611 = vpop.f32.mrf.mxu0
    %v612 = vadd.f32 %v85, %v611
    %v613 = vpop.f32.mrf.mxu0
    %614 = vmatprep.mubr.f32.mxu0 0.0
    %615 = vmatmul.mubr.f32.gmra.mxu0 %v251
    %v616 = vpop.f32.mrf.mxu0
    %v617 = vadd.f32 %v85, %v616
    %v618 = vpop.f32.mrf.mxu0
    %619 = vmatprep.mubr.f32.mxu0 0.0
    %620 = vmatmul.mubr.f32.gmra.mxu0 %v254
    %v621 = vpop.f32.mrf.mxu0
    %v622 = vadd.f32 %v85, %v621
    %v623 = vpop.f32.mrf.mxu0
    %624 = vmatprep.mubr.f32.mxu0 0.0
    %625 = vmatmul.mubr.f32.gmra.mxu0 %v257
    %v626 = vpop.f32.mrf.mxu0
    %v627 = vadd.f32 %v85, %v626
    %v628 = vpop.f32.mrf.mxu0
    %629 = vmatprep.mubr.f32.mxu0 0.0
    %630 = vmatmul.mubr.f32.gmra.mxu0 %v260
    %v631 = vpop.f32.mrf.mxu0
    %v632 = vadd.f32 %v85, %v631
    %v633 = vpop.f32.mrf.mxu0
    %634 = vmatprep.mubr.f32.mxu0 0.0
    %635 = vmatmul.mubr.f32.gmra.mxu0 %v263
    %v636 = vpop.f32.mrf.mxu0
    %v637 = vadd.f32 %v85, %v636
    %v638 = vpop.f32.mrf.mxu0
    %639 = vmatprep.mubr.f32.mxu0 0.0
    %640 = vmatmul.mubr.f32.gmra.mxu0 %v266
    %v641 = vpop.f32.mrf.mxu0
    %v642 = vadd.f32 %v85, %v641
    %v643 = vpop.f32.mrf.mxu0
    %644 = vmatprep.mubr.f32.mxu0 0.0
    %645 = vmatmul.mubr.f32.gmra.mxu0 %v269
    %v646 = vpop.f32.mrf.mxu0
    %v647 = vadd.f32 %v85, %v646
    %v648 = vpop.f32.mrf.mxu0
    %649 = vmatprep.mubr.f32.mxu0 0.0
    %650 = vmatmul.mubr.f32.gmra.mxu0 %v272
    %v651 = vpop.f32.mrf.mxu0
    %v652 = vadd.f32 %v85, %v651
    %v653 = vpop.f32.mrf.mxu0
    %654 = vmatprep.mubr.f32.mxu0 0.0
    %655 = vmatmul.mubr.f32.gmra.mxu0 %v275
    %v656 = vpop.f32.mrf.mxu0
    %v657 = vadd.f32 %v85, %v656
    %v658 = vpop.f32.mrf.mxu0
    %659 = vmatprep.mubr.f32.mxu0 0.0
    %660 = vmatmul.mubr.f32.gmra.mxu0 %v278
    %v661 = vpop.f32.mrf.mxu0
    %v662 = vadd.f32 %v85, %v661
    %v663 = vpop.f32.mrf.mxu0
    %664 = vdwg.mxu0
    %v665 = vmax.f32 %v347, 0.0
    %v666 = vmax.f32 %v352, 0.0
    %v667 = vmax.f32 %v357, 0.0
    %v668 = vmax.f32 %v362, 0.0
    %v669 = vmax.f32 %v367, 0.0
    %v670 = vmax.f32 %v372, 0.0
    %v671 = vmax.f32 %v377, 0.0
    %v672 = vmax.f32 %v382, 0.0
    %v673 = vmax.f32 %v387, 0.0
    %v674 = vmax.f32 %v392, 0.0
    %v675 = vmax.f32 %v397, 0.0
    %v676 = vmax.f32 %v402, 0.0
    %v677 = vmax.f32 %v407, 0.0
    %v678 = vmax.f32 %v412, 0.0
    %v679 = vmax.f32 %v417, 0.0
    %v680 = vmax.f32 %v422, 0.0
    %v681 = vmax.f32 %v427, 0.0
    %v682 = vmax.f32 %v432, 0.0
    %v683 = vmax.f32 %v437, 0.0
    %v684 = vmax.f32 %v442, 0.0
    %v685 = vmax.f32 %v447, 0.0
    %v686 = vmax.f32 %v452, 0.0
    %v687 = vmax.f32 %v457, 0.0
    %v688 = vmax.f32 %v462, 0.0
    %v689 = vmax.f32 %v467, 0.0
    %v690 = vmax.f32 %v472, 0.0
    %v691 = vmax.f32 %v477, 0.0
    %v692 = vmax.f32 %v482, 0.0
    %v693 = vmax.f32 %v487, 0.0
    %v694 = vmax.f32 %v492, 0.0
    %v695 = vmax.f32 %v497, 0.0
    %v696 = vmax.f32 %v502, 0.0
    %v697 = vmax.f32 %v507, 0.0
    %v698 = vmax.f32 %v512, 0.0
    %v699 = vmax.f32 %v517, 0.0
    %v700 = vmax.f32 %v522, 0.0
    %v701 = vmax.f32 %v527, 0.0
    %v702 = vmax.f32 %v532, 0.0
    %v703 = vmax.f32 %v537, 0.0
    %v704 = vmax.f32 %v542, 0.0
    %v705 = vmax.f32 %v547, 0.0
    %v706 = vmax.f32 %v552, 0.0
    %v707 = vmax.f32 %v557, 0.0
    %v708 = vmax.f32 %v562, 0.0
    %v709 = vmax.f32 %v567, 0.0
    %v710 = vmax.f32 %v572, 0.0
    %v711 = vmax.f32 %v577, 0.0
    %v712 = vmax.f32 %v582, 0.0
    %v713 = vmax.f32 %v587, 0.0
    %v714 = vmax.f32 %v592, 0.0
    %v715 = vmax.f32 %v597, 0.0
    %v716 = vmax.f32 %v602, 0.0
    %v717 = vmax.f32 %v607, 0.0
    %v718 = vmax.f32 %v612, 0.0
    %v719 = vmax.f32 %v617, 0.0
    %v720 = vmax.f32 %v622, 0.0
    %v721 = vmax.f32 %v627, 0.0
    %v722 = vmax.f32 %v632, 0.0
    %v723 = vmax.f32 %v637, 0.0
    %v724 = vmax.f32 %v642, 0.0
    %v725 = vmax.f32 %v647, 0.0
    %v726 = vmax.f32 %v652, 0.0
    %v727 = vmax.f32 %v657, 0.0
    %v728 = vmax.f32 %v662, 0.0
    %729 = vst [vmem:[#allocation2] sm:$0xff] %v665
    %730 = vst [vmem:[#allocation2 + $0x8] sm:$0xff] %v666
    %731 = vst [vmem:[#allocation2 + $0x10] sm:$0xff] %v667
    %732 = vst [vmem:[#allocation2 + $0x18] sm:$0xff] %v668
    %733 = vst [vmem:[#allocation2 + $0x20] sm:$0xff] %v669
    %734 = vst [vmem:[#allocation2 + $0x28] sm:$0xff] %v670
    %735 = vst [vmem:[#allocation2 + $0x30] sm:$0xff] %v671
    %736 = vst [vmem:[#allocation2 + $0x38] sm:$0xff] %v672
    %737 = vst [vmem:[#allocation2 + $0x40] sm:$0xff] %v673
    %738 = vst [vmem:[#allocation2 + $0x48] sm:$0xff] %v674
    %739 = vst [vmem:[#allocation2 + $0x50] sm:$0xff] %v675
    %740 = vst [vmem:[#allocation2 + $0x58] sm:$0xff] %v676
    %741 = vst [vmem:[#allocation2 + $0x60] sm:$0xff] %v677
    %742 = vst [vmem:[#allocation2 + $0x68] sm:$0xff] %v678
    %743 = vst [vmem:[#allocation2 + $0x70] sm:$0xff] %v679
    %744 = vst [vmem:[#allocation2 + $0x78] sm:$0xff] %v680
    %745 = vst [vmem:[#allocation2 + $0x80] sm:$0xff] %v681
    %746 = vst [vmem:[#allocation2 + $0x88] sm:$0xff] %v682
    %747 = vst [vmem:[#allocation2 + $0x90] sm:$0xff] %v683
    %748 = vst [vmem:[#allocation2 + $0x98] sm:$0xff] %v684
    %749 = vst [vmem:[#allocation2 + $0xa0] sm:$0xff] %v685
    %750 = vst [vmem:[#allocation2 + $0xa8] sm:$0xff] %v686
    %751 = vst [vmem:[#allocation2 + $0xb0] sm:$0xff] %v687
    %752 = vst [vmem:[#allocation2 + $0xb8] sm:$0xff] %v688
    %753 = vst [vmem:[#allocation2 + $0xc0] sm:$0xff] %v689
    %754 = vst [vmem:[#allocation2 + $0xc8] sm:$0xff] %v690
    %755 = vst [vmem:[#allocation2 + $0xd0] sm:$0xff] %v691
    %756 = vst [vmem:[#allocation2 + $0xd8] sm:$0xff] %v692
    %757 = vst [vmem:[#allocation2 + $0xe0] sm:$0xff] %v693
    %758 = vst [vmem:[#allocation2 + $0xe8] sm:$0xff] %v694
    %759 = vst [vmem:[#allocation2 + $0xf0] sm:$0xff] %v695
    %760 = vst [vmem:[#allocation2 + $0xf8] sm:$0xff] %v696
    %761 = vst [vmem:[#allocation2 + $0x100] sm:$0xff] %v697
    %762 = vst [vmem:[#allocation2 + $0x108] sm:$0xff] %v698
    %763 = vst [vmem:[#allocation2 + $0x110] sm:$0xff] %v699
    %764 = vst [vmem:[#allocation2 + $0x118] sm:$0xff] %v700
    %765 = vst [vmem:[#allocation2 + $0x120] sm:$0xff] %v701
    %766 = vst [vmem:[#allocation2 + $0x128] sm:$0xff] %v702
    %767 = vst [vmem:[#allocation2 + $0x130] sm:$0xff] %v703
    %768 = vst [vmem:[#allocation2 + $0x138] sm:$0xff] %v704
    %769 = vst [vmem:[#allocation2 + $0x140] sm:$0xff] %v705
    %770 = vst [vmem:[#allocation2 + $0x148] sm:$0xff] %v706
    %771 = vst [vmem:[#allocation2 + $0x150] sm:$0xff] %v707
    %772 = vst [vmem:[#allocation2 + $0x158] sm:$0xff] %v708
    %773 = vst [vmem:[#allocation2 + $0x160] sm:$0xff] %v709
    %774 = vst [vmem:[#allocation2 + $0x168] sm:$0xff] %v710
    %775 = vst [vmem:[#allocation2 + $0x170] sm:$0xff] %v711
    %776 = vst [vmem:[#allocation2 + $0x178] sm:$0xff] %v712
    %777 = vst [vmem:[#allocation2 + $0x180] sm:$0xff] %v713
    %778 = vst [vmem:[#allocation2 + $0x188] sm:$0xff] %v714
    %779 = vst [vmem:[#allocation2 + $0x190] sm:$0xff] %v715
    %780 = vst [vmem:[#allocation2 + $0x198] sm:$0xff] %v716
    %781 = vst [vmem:[#allocation2 + $0x1a0] sm:$0xff] %v717
    %782 = vst [vmem:[#allocation2 + $0x1a8] sm:$0xff] %v718
    %783 = vst [vmem:[#allocation2 + $0x1b0] sm:$0xff] %v719
    %784 = vst [vmem:[#allocation2 + $0x1b8] sm:$0xff] %v720
    %785 = vst [vmem:[#allocation2 + $0x1c0] sm:$0xff] %v721
    %786 = vst [vmem:[#allocation2 + $0x1c8] sm:$0xff] %v722
    %787 = vst [vmem:[#allocation2 + $0x1d0] sm:$0xff] %v723
    %788 = vst [vmem:[#allocation2 + $0x1d8] sm:$0xff] %v724
    %789 = vst [vmem:[#allocation2 + $0x1e0] sm:$0xff] %v725
    %790 = vst [vmem:[#allocation2 + $0x1e8] sm:$0xff] %v726
    %791 = vst [vmem:[#allocation2 + $0x1f0] sm:$0xff] %v727
    %792 = vst [vmem:[#allocation2 + $0x1f8] sm:$0xff] %v728
    // Predicated region
    $region14: #{tpu_custom_call.1} parent=1 // pred_check
      _
    $region15: #{tpu_custom_call.1} parent=1 // pred_check_branch
      %794 = sbr.rel (0) target = $region17
    $region16: #{tpu_custom_call.1} parent=1 // pred_region
      %s796 = ssub.s32 8192, 8192
      %797 = vsyncadd [#allocation3], %s796
      %s798 = sshll.u32 [#allocation2], 4
      %s799 = int_to_ptr.vmem [resolvable:$true] %s798
      %804 = dma.vmem_to_hbm [thread:$0]  %s799, 8192, %s3, [#allocation3], 128, 128, 8
    $region17: #{tpu_custom_call.1} parent=1 // pred_fallthru
      _
    // Predicated region
    $region18: #{tpu_custom_call.1} parent=1 // pred_check
      _
    $region19: #{tpu_custom_call.1} parent=1 // pred_check_branch
      %806 = sbr.rel (0) target = $region21
    $region20: #{tpu_custom_call.1} parent=1 // pred_region
      %807 = dma.done [#allocation3], 8192
    $region21: #{tpu_custom_call.1} parent=1 // pred_fallthru
      _
    %808 = vsyncpa [#allocation3], 1

</llo_original>
